<compile_context>
chip_gen: v7x
topology: tpu7x:2x2x1
jax: 0.10.0
libtpu: 0.0.40
codegen_flags: <defaults>
</compile_context>

<pallas_src>
import functools

import jax
import jax.numpy as jnp
from jax.experimental import pallas as pl
from jax.experimental.pallas import tpu as pltpu


# ---------------------------------------------------------------------------
# Kernels
# ---------------------------------------------------------------------------
def _fused_kernel(a_ref, xw1rel_ref, xw1root_ref, w2root_ref, w2rel_ref,
                  b2_ref, o_ref):
    """Whole-graph fused forward (A resident in VMEM, read once).

    a_ref       : [N, N]  int8   adjacency (A[i, j] = #edges j -> i)
    xw1rel_ref  : [N, H]  bf16   X @ W1_rel          (hoisted to wrapper)
    xw1root_ref : [N, H]  f32    X @ W1_root + b1    (hoisted to wrapper)
    w2root_ref  : [H, C]  bf16
    w2rel_ref   : [H, C]  bf16
    b2_ref      : [1, C]  f32
    o_ref       : [N, C]  f32    log_softmax output
    """
    a = a_ref[...].astype(jnp.bfloat16)            # int8 -> bf16, free VPU work
    # Layer 1: relu(A @ (X W1_rel) + (X W1_root + b1)), f32 accumulation.
    agg1 = jnp.dot(a, xw1rel_ref[...], preferred_element_type=jnp.float32)
    h1 = jnp.maximum(agg1 + xw1root_ref[...], 0.0)
    h1b = h1.astype(jnp.bfloat16)
    # Layer 2, associativity: A @ (h1 @ W2_rel)  (C-wide contraction, not H).
    # Two small dots instead of one + lane slice (no relayout, dense stores).
    t2_root = jnp.dot(h1b, w2root_ref[...], preferred_element_type=jnp.float32)
    t2_rel = jnp.dot(h1b, w2rel_ref[...], preferred_element_type=jnp.float32)
    agg2 = jnp.dot(a, t2_rel.astype(jnp.bfloat16),
                   preferred_element_type=jnp.float32)
    h2 = t2_root + agg2 + b2_ref[...]
    # Row-wise log_softmax in f32.
    m = jnp.max(h2, axis=1, keepdims=True)
    z = h2 - m
    lse = jnp.log(jnp.sum(jnp.exp(z), axis=1, keepdims=True))
    o_ref[...] = z - lse


def _conv1_kernel(a_ref, xw1rel_ref, xw1root_ref, w2_ref, t2_ref):
    """Tiled pass 1: layer-1 conv (+ReLU) and the layer-2 feature transform.

    a_ref       : [TN, N]  int8   adjacency row slab
    xw1rel_ref  : [N,  H]  bf16   full X @ W1_rel
    xw1root_ref : [TN, H]  f32    this tile's X @ W1_root + b1
    w2_ref      : [H, 2C]  bf16   [W2_root | W2_rel]
    t2_ref      : [TN, 2C] f32    h1 @ [W2_root | W2_rel]  (split in wrapper)
    """
    a = a_ref[...].astype(jnp.bfloat16)
    agg1 = jnp.dot(a, xw1rel_ref[...], preferred_element_type=jnp.float32)
    h1 = jnp.maximum(agg1 + xw1root_ref[...], 0.0)
    t2_ref[...] = jnp.dot(h1.astype(jnp.bfloat16), w2_ref[...],
                          preferred_element_type=jnp.float32)


def _conv2_kernel(a_ref, t2root_ref, t2rel_ref, b2_ref, o_ref):
    """Tiled pass 2: layer-2 aggregation + bias + row-wise log_softmax.

    a_ref      : [TN, N] int8
    t2root_ref : [TN, C] f32    this tile's root term
    t2rel_ref  : [N,  C] f32    all nodes' h1 @ W2_rel (cast at the dot)
    b2_ref     : [1,  C] f32
    o_ref      : [TN, C] f32
    """
    a = a_ref[...].astype(jnp.bfloat16)
    agg2 = jnp.dot(a, t2rel_ref[...].astype(jnp.bfloat16),
                   preferred_element_type=jnp.float32)
    h2 = t2root_ref[...] + agg2 + b2_ref[...]
    m = jnp.max(h2, axis=1, keepdims=True)
    z = h2 - m
    lse = jnp.log(jnp.sum(jnp.exp(z), axis=1, keepdims=True))
    o_ref[...] = z - lse


# ---------------------------------------------------------------------------
# Wrapper
# ---------------------------------------------------------------------------
def build_adjacency(edge_index, num_nodes):
    """Dense adjacency A[i, j] = #edges (j -> i), as the int8 streaming dtype.

    Built once per (static) graph, OUTSIDE the per-forward jit, so the N^2
    scatter is not re-executed every call.  int8 halves the dominant HBM
    stream vs bf16; edge multiplicities must fit in int8.
    """
    src, dst = edge_index[0], edge_index[1]
    adj = jnp.zeros((num_nodes, num_nodes), jnp.int32).at[dst, src].add(1)
    max_mult = int(jnp.max(adj))
    assert max_mult <= 127, f"edge multiplicity {max_mult} overflows int8"
    return adj.astype(jnp.int8)


@functools.partial(jax.jit, static_argnames=("tile_n", "force_tiled"))
def graphnet_forward(x, adj_i8, params, *, tile_n=256, force_tiled=False):
    """x: [N, F] float32 node features, adj_i8: [N, N] int8 adjacency."""
    n, _ = x.shape
    hidden = params["w1_root"].shape[1]
    num_classes = params["w2_root"].shape[1]

    # Hoisted layer-1 feature transforms (tiny [N,F]@[F,H] matmuls in XLA).
    xw1rel = jnp.dot(x, params["w1_rel"]).astype(jnp.bfloat16)          # [N,H]
    xw1root = (jnp.dot(x, params["w1_root"])
               + params["b1"][None, :]).astype(jnp.float32)             # [N,H]
    w2_root = params["w2_root"].astype(jnp.bfloat16)                    # [H,C]
    w2_rel = params["w2_rel"].astype(jnp.bfloat16)                      # [H,C]
    b2 = params["b2"].reshape(1, num_classes).astype(jnp.float32)

    # 48 MiB is safe on every generation (v7x physical VMEM is 64 MiB/TC;
    # v5e/v6e have 128 MiB and could go higher for bigger tiles).
    vmem_limit = 48 * 1024 * 1024

    # Estimated resident VMEM footprint of the fully fused single-call path.
    fused_bytes = (n * n                                 # int8 adjacency
                   + n * hidden * (2 + 4 + 4 + 4)        # xw1rel/xw1root/h1/agg1
                   + n * num_classes * 4 * 4)            # t2 terms / output
    if not force_tiled and fused_bytes <= 12 * 1024 * 1024:
        # Small graph: one launch, adjacency read from HBM exactly once.
        return pl.pallas_call(
            _fused_kernel,
            grid=(1,),
            in_specs=[
                pl.BlockSpec((n, n), lambda i: (0, 0)),
                pl.BlockSpec((n, hidden), lambda i: (0, 0)),
                pl.BlockSpec((n, hidden), lambda i: (0, 0)),
                pl.BlockSpec((hidden, num_classes), lambda i: (0, 0)),
                pl.BlockSpec((hidden, num_classes), lambda i: (0, 0)),
                pl.BlockSpec((1, num_classes), lambda i: (0, 0)),
            ],
            out_specs=pl.BlockSpec((n, num_classes), lambda i: (0, 0)),
            out_shape=jax.ShapeDtypeStruct((n, num_classes), jnp.float32),
            compiler_params=pltpu.CompilerParams(vmem_limit_bytes=vmem_limit),
        )(adj_i8, xw1rel, xw1root, w2_root, w2_rel, b2)

    # ------------------- row-tiled two-pass path (large N) -----------------
    tn = min(tile_n, n)
    # int8 operands pack 4 rows/sublane -> keep tiles a multiple of 32 rows.
    assert n % tn == 0 and tn % 32 == 0, (n, tn)
    grid = (n // tn,)
    row_blk = lambda i: (i, 0)
    full_blk = lambda i: (0, 0)
    cparams = pltpu.CompilerParams(
        dimension_semantics=("parallel",),       # shard row tiles across TCs
        vmem_limit_bytes=vmem_limit,
    )
    w2 = jnp.concatenate([w2_root, w2_rel], axis=1)                  # [H, 2C]

    # Pass 1: t2 = relu(A_tile @ XW1rel + XW1root_tile) @ [W2_root | W2_rel].
    t2 = pl.pallas_call(
        _conv1_kernel,
        grid=grid,
        in_specs=[
            pl.BlockSpec((tn, n), row_blk),                # int8 adjacency slab
            pl.BlockSpec((n, hidden), full_blk),           # full X @ W1_rel
            pl.BlockSpec((tn, hidden), row_blk),           # tile's X@W1_root+b1
            pl.BlockSpec((hidden, 2 * num_classes), full_blk),
        ],
        out_specs=pl.BlockSpec((tn, 2 * num_classes), row_blk),
        out_shape=jax.ShapeDtypeStruct((n, 2 * num_classes), jnp.float32),
        compiler_params=cparams,
    )(adj_i8, xw1rel, xw1root, w2)

    t2_root = t2[:, :num_classes]            # free XLA-level slices (wrapper)
    t2_rel = t2[:, num_classes:]

    # Pass 2: A @ (h1 @ W2_rel) + root term + bias, then log_softmax.
    out = pl.pallas_call(
        _conv2_kernel,
        grid=grid,
        in_specs=[
            pl.BlockSpec((tn, n), row_blk),
            pl.BlockSpec((tn, num_classes), row_blk),
            pl.BlockSpec((n, num_classes), full_blk),
            pl.BlockSpec((1, num_classes), full_blk),
        ],
        out_specs=pl.BlockSpec((tn, num_classes), row_blk),
        out_shape=jax.ShapeDtypeStruct((n, num_classes), jnp.float32),
        compiler_params=cparams,
    )(adj_i8, t2_root, t2_rel, b2)
    return out


# ---------------------------------------------------------------------------
# Pure-JAX reference mirroring the kernels' mixed-precision math
# ---------------------------------------------------------------------------
def graphnet_reference(x, adj_i8, params):
    a = adj_i8.astype(jnp.bfloat16)
    xw1rel = jnp.dot(x, params["w1_rel"]).astype(jnp.bfloat16)
    xw1root = jnp.dot(x, params["w1_root"]) + params["b1"][None, :]
    h1 = jnp.maximum(
        jnp.dot(a, xw1rel, preferred_element_type=jnp.float32) + xw1root, 0.0)
    h1b = h1.astype(jnp.bfloat16)
    t2_root = jnp.dot(h1b, params["w2_root"].astype(jnp.bfloat16),
                      preferred_element_type=jnp.float32)
    t2_rel = jnp.dot(h1b, params["w2_rel"].astype(jnp.bfloat16),
                     preferred_element_type=jnp.float32)
    agg2 = jnp.dot(a, t2_rel.astype(jnp.bfloat16),
                   preferred_element_type=jnp.float32)
    h2 = t2_root + agg2 + params["b2"][None, :]
    return jax.nn.log_softmax(h2, axis=1)


def init_params(key, num_node_features, hidden, num_classes):
    ks = jax.random.split(key, 6)
    s1 = 1.0 / jnp.sqrt(num_node_features)
    s2 = 1.0 / jnp.sqrt(hidden)
    return {
        "w1_root": jax.random.uniform(ks[0], (num_node_features, hidden),
                                      jnp.float32, -s1, s1),
        "w1_rel":  jax.random.uniform(ks[1], (num_node_features, hidden),
                                      jnp.float32, -s1, s1),
        "b1":      jax.random.uniform(ks[2], (hidden,), jnp.float32, -s1, s1),
        "w2_root": jax.random.uniform(ks[3], (hidden, num_classes),
                                      jnp.float32, -s2, s2),
        "w2_rel":  jax.random.uniform(ks[4], (hidden, num_classes),
                                      jnp.float32, -s2, s2),
        "b2":      jax.random.uniform(ks[5], (num_classes,), jnp.float32,
                                      -s2, s2),
    }


if __name__ == "__main__":
    key = jax.random.PRNGKey(0)
    F_IN = 8               # dataset.num_node_features
    HIDDEN = 64
    NUM_CLASSES = 8        # dataset.num_classes

    k_x, k_e, k_p = jax.random.split(key, 3)
    params = init_params(k_p, F_IN, HIDDEN, NUM_CLASSES)

    # --- small graph: fully fused single-pallas_call path ------------------
    N1, E1 = 128, 512
    x1 = jax.random.normal(k_x, (N1, F_IN), dtype=jnp.float32)
    edge_index1 = jax.random.randint(k_e, (2, E1), 0, N1, dtype=jnp.int32)
    adj1 = build_adjacency(edge_index1, N1)

    out1 = graphnet_forward(x1, adj1, params)
    jax.block_until_ready(out1)
    assert out1.shape == (N1, NUM_CLASSES)
    row_sums = jnp.sum(jnp.exp(out1), axis=1)
    assert bool(jnp.all(jnp.abs(row_sums - 1.0) < 1e-4))
    ref1 = graphnet_reference(x1, adj1, params)
    assert bool(jnp.allclose(out1, ref1, atol=2e-2, rtol=2e-2))

    # --- larger graph forced through the row-tiled two-pass path -----------
    N2, E2 = 256, 2048
    k_x2, k_e2 = jax.random.split(jax.random.PRNGKey(1), 2)
    x2 = jax.random.normal(k_x2, (N2, F_IN), dtype=jnp.float32)
    edge_index2 = jax.random.randint(k_e2, (2, E2), 0, N2, dtype=jnp.int32)
    adj2 = build_adjacency(edge_index2, N2)

    out2 = graphnet_forward(x2, adj2, params, tile_n=64, force_tiled=True)
    jax.block_until_ready(out2)
    assert out2.shape == (N2, NUM_CLASSES)
    ref2 = graphnet_reference(x2, adj2, params)
    assert bool(jnp.allclose(out2, ref2, atol=2e-2, rtol=2e-2))

    print("KERNEL_OK")
</pallas_src>

<mosaic_0001>
module attributes {stable_mosaic.version = 11 : i64} {
  func.func @_fused_kernel(%arg0: i32, %arg1: memref<128x128xi8, #tpu.memory_space<vmem>>, %arg2: memref<128x64xbf16, #tpu.memory_space<vmem>>, %arg3: memref<128x64xf32, #tpu.memory_space<vmem>>, %arg4: memref<64x8xbf16, #tpu.memory_space<vmem>>, %arg5: memref<64x8xbf16, #tpu.memory_space<vmem>>, %arg6: memref<1x8xf32, #tpu.memory_space<vmem>>, %arg7: memref<128x8xf32, #tpu.memory_space<vmem>>) attributes {dimension_semantics = [#tpu.dimension_semantics<arbitrary>], iteration_bounds = array<i64: 1>, scalar_prefetch = 0 : i64, scratch_operands = 0 : i64, tpu.core_type = #tpu.core_type<tc>, window_params = [{pipeline_mode = #tpu.pipeline_mode<synchronous>, transform_indices = @transform_0, window_bounds = array<i64: 128, 128>}, {pipeline_mode = #tpu.pipeline_mode<synchronous>, transform_indices = @transform_1, window_bounds = array<i64: 128, 64>}, {pipeline_mode = #tpu.pipeline_mode<synchronous>, transform_indices = @transform_2, window_bounds = array<i64: 128, 64>}, {pipeline_mode = #tpu.pipeline_mode<synchronous>, transform_indices = @transform_3, window_bounds = array<i64: 64, 8>}, {pipeline_mode = #tpu.pipeline_mode<synchronous>, transform_indices = @transform_4, window_bounds = array<i64: 64, 8>}, {pipeline_mode = #tpu.pipeline_mode<synchronous>, transform_indices = @transform_5, window_bounds = array<i64: 1, 8>}, {pipeline_mode = #tpu.pipeline_mode<synchronous>, transform_indices = @transform_6, window_bounds = array<i64: 128, 8>}]} {
    %c0 = arith.constant 0 : index
    %c0_0 = arith.constant 0 : index
    %0 = vector.load %arg1[%c0, %c0_0] : memref<128x128xi8, #tpu.memory_space<vmem>>, vector<128x128xi8>
    %1 = arith.sitofp %0 : vector<128x128xi8> to vector<128x128xbf16>
    %c0_1 = arith.constant 0 : index
    %c0_2 = arith.constant 0 : index
    %2 = vector.load %arg2[%c0_1, %c0_2] : memref<128x64xbf16, #tpu.memory_space<vmem>>, vector<128x64xbf16>
    %cst = arith.constant dense<0.000000e+00> : vector<128x64xf32>
    %3 = tpu.matmul %1, %2, %cst {dimension_numbers = #tpu.dot_dimension_numbers<[1], [0], [0], [1], [0, 0, 1, 1], [], []>} : vector<128x128xbf16>, vector<128x64xbf16>, vector<128x64xf32> -> vector<128x64xf32>
    %c0_3 = arith.constant 0 : index
    %c0_4 = arith.constant 0 : index
    %4 = vector.load %arg3[%c0_3, %c0_4] : memref<128x64xf32, #tpu.memory_space<vmem>>, vector<128x64xf32>
    %5 = arith.addf %3, %4 : vector<128x64xf32>
    %cst_5 = arith.constant 0.000000e+00 : f32
    %6 = vector.broadcast %cst_5 : f32 to vector<128x64xf32>
    %7 = arith.maximumf %5, %6 : vector<128x64xf32>
    %8 = arith.truncf %7 : vector<128x64xf32> to vector<128x64xbf16>
    %c0_6 = arith.constant 0 : index
    %c0_7 = arith.constant 0 : index
    %9 = vector.load %arg4[%c0_6, %c0_7] : memref<64x8xbf16, #tpu.memory_space<vmem>>, vector<64x8xbf16>
    %cst_8 = arith.constant dense<0.000000e+00> : vector<128x8xf32>
    %10 = tpu.matmul %8, %9, %cst_8 {dimension_numbers = #tpu.dot_dimension_numbers<[1], [0], [0], [1], [0, 0, 1, 1], [], []>} : vector<128x64xbf16>, vector<64x8xbf16>, vector<128x8xf32> -> vector<128x8xf32>
    %c0_9 = arith.constant 0 : index
    %c0_10 = arith.constant 0 : index
    %11 = vector.load %arg5[%c0_9, %c0_10] : memref<64x8xbf16, #tpu.memory_space<vmem>>, vector<64x8xbf16>
    %cst_11 = arith.constant dense<0.000000e+00> : vector<128x8xf32>
    %12 = tpu.matmul %8, %11, %cst_11 {dimension_numbers = #tpu.dot_dimension_numbers<[1], [0], [0], [1], [0, 0, 1, 1], [], []>} : vector<128x64xbf16>, vector<64x8xbf16>, vector<128x8xf32> -> vector<128x8xf32>
    %13 = arith.truncf %12 : vector<128x8xf32> to vector<128x8xbf16>
    %cst_12 = arith.constant dense<0.000000e+00> : vector<128x8xf32>
    %14 = tpu.matmul %1, %13, %cst_12 {dimension_numbers = #tpu.dot_dimension_numbers<[1], [0], [0], [1], [0, 0, 1, 1], [], []>} : vector<128x128xbf16>, vector<128x8xbf16>, vector<128x8xf32> -> vector<128x8xf32>
    %15 = arith.addf %10, %14 : vector<128x8xf32>
    %c0_13 = arith.constant 0 : index
    %c0_14 = arith.constant 0 : index
    %16 = vector.load %arg6[%c0_13, %c0_14] : memref<1x8xf32, #tpu.memory_space<vmem>>, vector<1x8xf32>
    %17 = vector.broadcast %16 : vector<1x8xf32> to vector<128x8xf32>
    %18 = arith.addf %15, %17 : vector<128x8xf32>
    %cst_15 = arith.constant dense<0xFF800000> : vector<128xf32>
    %19 = vector.multi_reduction <maximumf>, %18, %cst_15 [1] : vector<128x8xf32> to vector<128xf32>
    %20 = vector.shape_cast %19 : vector<128xf32> to vector<128x1xf32>
    %21 = vector.broadcast %20 : vector<128x1xf32> to vector<128x8xf32>
    %22 = arith.subf %18, %21 : vector<128x8xf32>
    %23 = math.exp %22 : vector<128x8xf32>
    %cst_16 = arith.constant dense<0.000000e+00> : vector<128xf32>
    %24 = vector.multi_reduction <add>, %23, %cst_16 [1] : vector<128x8xf32> to vector<128xf32>
    %25 = vector.shape_cast %24 : vector<128xf32> to vector<128x1xf32>
    %26 = math.log %25 : vector<128x1xf32>
    %27 = vector.broadcast %26 : vector<128x1xf32> to vector<128x8xf32>
    %28 = arith.subf %22, %27 : vector<128x8xf32>
    %c0_17 = arith.constant 0 : index
    %c0_18 = arith.constant 0 : index
    %29 = vector.load %arg7[%c0_17, %c0_18] : memref<128x8xf32, #tpu.memory_space<vmem>>, vector<128x8xf32>
    tpu.vector_store %arg7[%c0_17, %c0_18], %28 {strides = array<i32>} : memref<128x8xf32, #tpu.memory_space<vmem>>, vector<128x8xf32>,
    return
  }
  func.func @transform_0(%arg0: i32) -> (i32, i32) {
    %c0_i32 = arith.constant 0 : i32
    %c0_i32_0 = arith.constant 0 : i32
    %c0_i32_1 = arith.constant 0 : i32
    return %c0_i32, %c0_i32_0 : i32, i32
  }
  func.func @transform_1(%arg0: i32) -> (i32, i32) {
    %c0_i32 = arith.constant 0 : i32
    %c0_i32_0 = arith.constant 0 : i32
    %c0_i32_1 = arith.constant 0 : i32
    return %c0_i32, %c0_i32_0 : i32, i32
  }
  func.func @transform_2(%arg0: i32) -> (i32, i32) {
    %c0_i32 = arith.constant 0 : i32
    %c0_i32_0 = arith.constant 0 : i32
    %c0_i32_1 = arith.constant 0 : i32
    return %c0_i32, %c0_i32_0 : i32, i32
  }
  func.func @transform_3(%arg0: i32) -> (i32, i32) {
    %c0_i32 = arith.constant 0 : i32
    %c0_i32_0 = arith.constant 0 : i32
    %c0_i32_1 = arith.constant 0 : i32
    return %c0_i32, %c0_i32_0 : i32, i32
  }
  func.func @transform_4(%arg0: i32) -> (i32, i32) {
    %c0_i32 = arith.constant 0 : i32
    %c0_i32_0 = arith.constant 0 : i32
    %c0_i32_1 = arith.constant 0 : i32
    return %c0_i32, %c0_i32_0 : i32, i32
  }
  func.func @transform_5(%arg0: i32) -> (i32, i32) {
    %c0_i32 = arith.constant 0 : i32
    %c0_i32_0 = arith.constant 0 : i32
    %c0_i32_1 = arith.constant 0 : i32
    return %c0_i32, %c0_i32_0 : i32, i32
  }
  func.func @transform_6(%arg0: i32) -> (i32, i32) {
    %c0_i32 = arith.constant 0 : i32
    %c0_i32_0 = arith.constant 0 : i32
    %c0_i32_1 = arith.constant 0 : i32
    return %c0_i32, %c0_i32_0 : i32, i32
  }
}

</mosaic_0001>

<llo_original>
// kernel: graphnet_forward.1
$region0: #{graphnet_forward.1}
  #allocation0 [shape = 'u32[]', space=smem, size = 0x4, offset = 0x4, fixed_abs, tag = 'smem constant byte address 0x4 - core index']
  #allocation1 [shape = 'u32[144,128]{1,0:T(1,128)}', space=vmem, size = 0x12000, scoped, tag = 'internal scratch']
  %s0 = inlined_call_operand.vmem [shape: s8[128,128], index: 0, kind: input, shape index: {}]
  %s1 = inlined_call_operand.vmem [shape: bf16[128,64], index: 1, kind: input, shape index: {}]
  %s2 = inlined_call_operand.vmem [shape: f32[128,64], index: 2, kind: input, shape index: {}]
  %s3 = inlined_call_operand.vmem [shape: bf16[64,8], index: 3, kind: input, shape index: {}]
  %s4 = inlined_call_operand.vmem [shape: bf16[64,8], index: 4, kind: input, shape index: {}]
  %s5 = inlined_call_operand.vmem [shape: f32[1,8], index: 5, kind: input, shape index: {}]
  %s6 = inlined_call_operand.vmem [shape: f32[128,8], index: 6, kind: output, shape index: {}]
  %s7 = sld [smem:[#allocation0]]
  $region34: #{graphnet_forward.1} parent=0
    _
  %s9 = ssub.s32 1, %s7
  %s10 = scalar_select 0, %s9, %s7
  // Predicated region
  $region2: #{graphnet_forward.1} parent=0 // pred_check
    _
  $region3: #{graphnet_forward.1} parent=0 // pred_check_branch
    %12 = sbr.rel (0) target = $region5
  $region4: #{graphnet_forward.1} parent=0 // pred_region
    _
  $region5: #{graphnet_forward.1} parent=0 // pred_fallthru
    _
  // Predicated region
  $region6: #{graphnet_forward.1} parent=0 // pred_check
    _
  $region7: #{graphnet_forward.1} parent=0 // pred_check_branch
    %14 = sbr.rel (0) target = $region9
  $region8: #{graphnet_forward.1} parent=0 // pred_region
    _
  $region9: #{graphnet_forward.1} parent=0 // pred_fallthru
    _
  // Predicated region
  $region10: #{graphnet_forward.1} parent=0 // pred_check
    _
  $region11: #{graphnet_forward.1} parent=0 // pred_check_branch
    %16 = sbr.rel (0) target = $region13
  $region12: #{graphnet_forward.1} parent=0 // pred_region
    _
  $region13: #{graphnet_forward.1} parent=0 // pred_fallthru
    _
  // Predicated region
  $region14: #{graphnet_forward.1} parent=0 // pred_check
    _
  $region15: #{graphnet_forward.1} parent=0 // pred_check_branch
    %18 = sbr.rel (0) target = $region17
  $region16: #{graphnet_forward.1} parent=0 // pred_region
    _
  $region17: #{graphnet_forward.1} parent=0 // pred_fallthru
    _
  // Predicated region
  $region18: #{graphnet_forward.1} parent=0 // pred_check
    _
  $region19: #{graphnet_forward.1} parent=0 // pred_check_branch
    %20 = sbr.rel (0) target = $region21
  $region20: #{graphnet_forward.1} parent=0 // pred_region
    _
  $region21: #{graphnet_forward.1} parent=0 // pred_fallthru
    _
  // Predicated region
  $region22: #{graphnet_forward.1} parent=0 // pred_check
    _
  $region23: #{graphnet_forward.1} parent=0 // pred_check_branch
    %22 = sbr.rel (0) target = $region25
  $region24: #{graphnet_forward.1} parent=0 // pred_region
    _
  $region25: #{graphnet_forward.1} parent=0 // pred_fallthru
    _
  %v24 = vld [vmem:[%s0] sm:$0xff]
  %v25 = vld [vmem:[%s0 + $0x8] sm:$0xff]
  %v26 = vld [vmem:[%s0 + $0x10] sm:$0xff]
  %v27 = vld [vmem:[%s0 + $0x18] sm:$0xff]
  %v28 = vunpack.c.l.s8.bf16 %v24
  %v29 = vunpack.c.h.s8.bf16 %v24
  %v30 = vunpack.c.l.s8.bf16 %v25
  %v31 = vunpack.c.h.s8.bf16 %v25
  %v32 = vunpack.c.l.s8.bf16 %v26
  %v33 = vunpack.c.h.s8.bf16 %v26
  %v34 = vunpack.c.l.s8.bf16 %v27
  %v35 = vunpack.c.h.s8.bf16 %v27
  %v36 = vld [vmem:[%s1] sm:$0xf]
  %v37 = vld [vmem:[%s1 + $0x4] sm:$0xf]
  %v38 = vld [vmem:[%s1 + $0x8] sm:$0xf]
  %v39 = vld [vmem:[%s1 + $0xc] sm:$0xf]
  %v40 = vld [vmem:[%s1 + $0x10] sm:$0xf]
  %v41 = vld [vmem:[%s1 + $0x14] sm:$0xf]
  %v42 = vld [vmem:[%s1 + $0x18] sm:$0xf]
  %v43 = vld [vmem:[%s1 + $0x1c] sm:$0xf]
  %v44 = vld [vmem:[%s1 + $0x20] sm:$0xf]
  %v45 = vld [vmem:[%s1 + $0x24] sm:$0xf]
  %v46 = vld [vmem:[%s1 + $0x28] sm:$0xf]
  %v47 = vld [vmem:[%s1 + $0x2c] sm:$0xf]
  %v48 = vld [vmem:[%s1 + $0x30] sm:$0xf]
  %v49 = vld [vmem:[%s1 + $0x34] sm:$0xf]
  %v50 = vld [vmem:[%s1 + $0x38] sm:$0xf]
  %v51 = vld [vmem:[%s1 + $0x3c] sm:$0xf]
  %v52 = vld [vmem:[%s2] sm:$0xff]
  %v53 = vld [vmem:[%s2 + $0x8] sm:$0xff]
  %v54 = vld [vmem:[%s2 + $0x10] sm:$0xff]
  %v55 = vld [vmem:[%s2 + $0x18] sm:$0xff]
  %v56 = vld [vmem:[%s2 + $0x20] sm:$0xff]
  %v57 = vld [vmem:[%s2 + $0x28] sm:$0xff]
  %v58 = vld [vmem:[%s2 + $0x30] sm:$0xff]
  %v59 = vld [vmem:[%s2 + $0x38] sm:$0xff]
  %v60 = vld [vmem:[%s2 + $0x40] sm:$0xff]
  %v61 = vld [vmem:[%s2 + $0x48] sm:$0xff]
  %v62 = vld [vmem:[%s2 + $0x50] sm:$0xff]
  %v63 = vld [vmem:[%s2 + $0x58] sm:$0xff]
  %v64 = vld [vmem:[%s2 + $0x60] sm:$0xff]
  %v65 = vld [vmem:[%s2 + $0x68] sm:$0xff]
  %v66 = vld [vmem:[%s2 + $0x70] sm:$0xff]
  %v67 = vld [vmem:[%s2 + $0x78] sm:$0xff]
  %v84 = vunpack.c.l.b16 %v36
  %v85 = vunpack.c.l.b16 %v37
  %v86 = vunpack.c.l.b16 %v38
  %v87 = vunpack.c.l.b16 %v39
  %v88 = vunpack.c.l.b16 %v40
  %v89 = vunpack.c.l.b16 %v41
  %v90 = vunpack.c.l.b16 %v42
  %v91 = vunpack.c.l.b16 %v43
  %v92 = vunpack.c.l.b16 %v44
  %v93 = vunpack.c.l.b16 %v45
  %v94 = vunpack.c.l.b16 %v46
  %v95 = vunpack.c.l.b16 %v47
  %v96 = vunpack.c.l.b16 %v48
  %v97 = vunpack.c.l.b16 %v49
  %v98 = vunpack.c.l.b16 %v50
  %v99 = vunpack.c.l.b16 %v51
  %v100 = vpack.c.b16 %v85, %v84
  %v101 = vpack.c.b16 %v87, %v86
  %v102 = vpack.c.b16 %v89, %v88
  %v103 = vpack.c.b16 %v91, %v90
  %v104 = vpack.c.b16 %v93, %v92
  %v105 = vpack.c.b16 %v95, %v94
  %v106 = vpack.c.b16 %v97, %v96
  %v107 = vpack.c.b16 %v99, %v98
  %116 = vmatprep.subr.bf16.mxu0 0
  %117 = vmatpush1.bf16.msra.mxu0 %v100
  %118 = vmatprep.subr.bf16.mxu0 0
  %119 = vmatpush1.bf16.msra.mxu0 %v101
  %120 = vmatprep.subr.bf16.mxu0 0
  %121 = vmatpush1.bf16.msra.mxu0 %v102
  %122 = vmatprep.subr.bf16.mxu0 0
  %123 = vmatpush1.bf16.msra.mxu0 %v103
  %124 = vmatprep.subr.bf16.mxu0 0
  %125 = vmatpush1.bf16.msra.mxu0 %v104
  %126 = vmatprep.subr.bf16.mxu0 0
  %127 = vmatpush1.bf16.msra.mxu0 %v105
  %128 = vmatprep.subr.bf16.mxu0 0
  %129 = vmatpush1.bf16.msra.mxu0 %v106
  %130 = vmatprep.subr.bf16.mxu0 0
  %131 = vmatpush1.bf16.msra.mxu0 %v107
  %132 = vmatprep.subr.bf16.mxu0 0
  %133 = vmatpush1.bf16.msra.mxu0 0
  %134 = vmatprep.subr.bf16.mxu0 0
  %135 = vmatpush1.bf16.msra.mxu0 0
  %136 = vmatprep.subr.bf16.mxu0 0
  %137 = vmatpush1.bf16.msra.mxu0 0
  %138 = vmatprep.subr.bf16.mxu0 0
  %139 = vmatpush1.bf16.msra.mxu0 0
  %140 = vmatprep.subr.bf16.mxu0 0
  %141 = vmatpush1.bf16.msra.mxu0 0
  %142 = vmatprep.subr.bf16.mxu0 0
  %143 = vmatpush1.bf16.msra.mxu0 0
  %144 = vmatprep.subr.bf16.mxu0 0
  %145 = vmatpush1.bf16.msra.mxu0 0
  %146 = vmatprep.subr.bf16.mxu0 0
  %147 = vmatpush1.bf16.msra.mxu0 0
  %148 = vmatprep.mubr.bf16.mxu0 0
  %149 = vmatmul.mubr.bf16.gmra.mrb[0].mxu0 %v28
  %v150 = vpop.f32.mrb[0].mxu0
  %v151 = vadd.f32 %v52, %v150
  %v152 = vpop.f32.mrb[0].mxu0
  %v153 = vpop.f32.mrb[0].mxu0
  %v154 = vadd.f32 %v53, %v153
  %v155 = vpop.f32.mrb[0].mxu0
  %156 = vmatprep.mubr.bf16.mxu0 0
  %157 = vmatmul.mubr.bf16.gmra.mrb[0].mxu0 %v29
  %v158 = vpop.f32.mrb[0].mxu0
  %v159 = vadd.f32 %v54, %v158
  %v160 = vpop.f32.mrb[0].mxu0
  %v161 = vpop.f32.mrb[0].mxu0
  %v162 = vadd.f32 %v55, %v161
  %v163 = vpop.f32.mrb[0].mxu0
  %164 = vmatprep.mubr.bf16.mxu0 0
  %165 = vmatmul.mubr.bf16.gmra.mrb[0].mxu0 %v30
  %v166 = vpop.f32.mrb[0].mxu0
  %v167 = vadd.f32 %v56, %v166
  %v168 = vpop.f32.mrb[0].mxu0
  %v169 = vpop.f32.mrb[0].mxu0
  %v170 = vadd.f32 %v57, %v169
  %v171 = vpop.f32.mrb[0].mxu0
  %172 = vmatprep.mubr.bf16.mxu0 0
  %173 = vmatmul.mubr.bf16.gmra.mrb[0].mxu0 %v31
  %v174 = vpop.f32.mrb[0].mxu0
  %v175 = vadd.f32 %v58, %v174
  %v176 = vpop.f32.mrb[0].mxu0
  %v177 = vpop.f32.mrb[0].mxu0
  %v178 = vadd.f32 %v59, %v177
  %v179 = vpop.f32.mrb[0].mxu0
  %180 = vmatprep.mubr.bf16.mxu0 0
  %181 = vmatmul.mubr.bf16.gmra.mrb[0].mxu0 %v32
  %v182 = vpop.f32.mrb[0].mxu0
  %v183 = vadd.f32 %v60, %v182
  %v184 = vpop.f32.mrb[0].mxu0
  %v185 = vpop.f32.mrb[0].mxu0
  %v186 = vadd.f32 %v61, %v185
  %v187 = vpop.f32.mrb[0].mxu0
  %188 = vmatprep.mubr.bf16.mxu0 0
  %189 = vmatmul.mubr.bf16.gmra.mrb[0].mxu0 %v33
  %v190 = vpop.f32.mrb[0].mxu0
  %v191 = vadd.f32 %v62, %v190
  %v192 = vpop.f32.mrb[0].mxu0
  %v193 = vpop.f32.mrb[0].mxu0
  %v194 = vadd.f32 %v63, %v193
  %v195 = vpop.f32.mrb[0].mxu0
  %196 = vmatprep.mubr.bf16.mxu0 0
  %197 = vmatmul.mubr.bf16.gmra.mrb[0].mxu0 %v34
  %v198 = vpop.f32.mrb[0].mxu0
  %v199 = vadd.f32 %v64, %v198
  %v200 = vpop.f32.mrb[0].mxu0
  %v201 = vpop.f32.mrb[0].mxu0
  %v202 = vadd.f32 %v65, %v201
  %v203 = vpop.f32.mrb[0].mxu0
  %204 = vmatprep.mubr.bf16.mxu0 0
  %205 = vmatmul.mubr.bf16.gmra.mrb[0].mxu0 %v35
  %v206 = vpop.f32.mrb[0].mxu0
  %v207 = vadd.f32 %v66, %v206
  %v208 = vpop.f32.mrb[0].mxu0
  %v209 = vpop.f32.mrb[0].mxu0
  %v210 = vadd.f32 %v67, %v209
  %v211 = vpop.f32.mrb[0].mxu0
  %212 = vdwg.mxu0
  %v213 = vmax.f32 %v151, 0.0
  %v214 = vmax.f32 %v154, 0.0
  %v215 = vmax.f32 %v159, 0.0
  %v216 = vmax.f32 %v162, 0.0
  %v217 = vmax.f32 %v167, 0.0
  %v218 = vmax.f32 %v170, 0.0
  %v219 = vmax.f32 %v175, 0.0
  %v220 = vmax.f32 %v178, 0.0
  %v221 = vmax.f32 %v183, 0.0
  %v222 = vmax.f32 %v186, 0.0
  %v223 = vmax.f32 %v191, 0.0
  %v224 = vmax.f32 %v194, 0.0
  %v225 = vmax.f32 %v199, 0.0
  %v226 = vmax.f32 %v202, 0.0
  %v227 = vmax.f32 %v207, 0.0
  %v228 = vmax.f32 %v210, 0.0
  %v229 = vpack.c.bf16 %v214, %v213
  %v230 = vpack.c.bf16 %v216, %v215
  %v231 = vpack.c.bf16 %v218, %v217
  %v232 = vpack.c.bf16 %v220, %v219
  %v233 = vpack.c.bf16 %v222, %v221
  %v234 = vpack.c.bf16 %v224, %v223
  %v235 = vpack.c.bf16 %v226, %v225
  %v236 = vpack.c.bf16 %v228, %v227
  %v237 = vld [vmem:[%s3] sm:$0xf]
  %v238 = vld [vmem:[%s3 + $0x4] sm:$0xf]
  %v239 = vld [vmem:[%s3 + $0x8] sm:$0xf]
  %v240 = vld [vmem:[%s3 + $0xc] sm:$0xf]
  %v241 = vld [vmem:[%s3 + $0x10] sm:$0xf]
  %v242 = vld [vmem:[%s3 + $0x14] sm:$0xf]
  %v243 = vld [vmem:[%s3 + $0x18] sm:$0xf]
  %v244 = vld [vmem:[%s3 + $0x1c] sm:$0xf]
  %v245 = vld [vmem:[%s4] sm:$0xf]
  %v246 = vld [vmem:[%s4 + $0x4] sm:$0xf]
  %v247 = vld [vmem:[%s4 + $0x8] sm:$0xf]
  %v248 = vld [vmem:[%s4 + $0xc] sm:$0xf]
  %v249 = vld [vmem:[%s4 + $0x10] sm:$0xf]
  %v250 = vld [vmem:[%s4 + $0x14] sm:$0xf]
  %v251 = vld [vmem:[%s4 + $0x18] sm:$0xf]
  %v252 = vld [vmem:[%s4 + $0x1c] sm:$0xf]
  %v261 = vunpack.c.l.b16 %v245
  %v262 = vunpack.c.l.b16 %v246
  %v263 = vunpack.c.l.b16 %v247
  %v264 = vunpack.c.l.b16 %v248
  %v265 = vunpack.c.l.b16 %v249
  %v266 = vunpack.c.l.b16 %v250
  %v267 = vunpack.c.l.b16 %v251
  %v268 = vunpack.c.l.b16 %v252
  %v269 = vpack.c.b16 %v262, %v261
  %v270 = vpack.c.b16 %v264, %v263
  %v271 = vpack.c.b16 %v266, %v265
  %v272 = vpack.c.b16 %v268, %v267
  %vm277 = vcmask 523264
  %v279 = vsel %vm277, %v229, 0
  %v282 = vsel %vm277, %v230, 0
  %v285 = vsel %vm277, %v231, 0
  %v288 = vsel %vm277, %v232, 0
  %v291 = vsel %vm277, %v233, 0
  %v294 = vsel %vm277, %v234, 0
  %v297 = vsel %vm277, %v235, 0
  %v300 = vsel %vm277, %v236, 0
  %302 = vmatprep.subr.bf16.mxu0 0
  %303 = vmatpush1.bf16.msra.mxu0 %v269
  %304 = vmatprep.subr.bf16.mxu0 0
  %305 = vmatpush1.bf16.msra.mxu0 %v270
  %306 = vmatprep.subr.bf16.mxu0 0
  %307 = vmatpush1.bf16.msra.mxu0 %v271
  %308 = vmatprep.subr.bf16.mxu0 0
  %309 = vmatpush1.bf16.msra.mxu0 %v272
  %310 = vmatprep.subr.bf16.mxu0 0
  %311 = vmatpush1.bf16.msra.mxu0 0
  %312 = vmatprep.subr.bf16.mxu0 0
  %313 = vmatpush1.bf16.msra.mxu0 0
  %314 = vmatprep.subr.bf16.mxu0 0
  %315 = vmatpush1.bf16.msra.mxu0 0
  %316 = vmatprep.subr.bf16.mxu0 0
  %317 = vmatpush1.bf16.msra.mxu0 0
  %318 = vmatprep.subr.bf16.mxu0 0
  %319 = vmatpush1.bf16.msra.mxu0 0
  %320 = vmatprep.subr.bf16.mxu0 0
  %321 = vmatpush1.bf16.msra.mxu0 0
  %322 = vmatprep.subr.bf16.mxu0 0
  %323 = vmatpush1.bf16.msra.mxu0 0
  %324 = vmatprep.subr.bf16.mxu0 0
  %325 = vmatpush1.bf16.msra.mxu0 0
  %326 = vmatprep.subr.bf16.mxu0 0
  %327 = vmatpush1.bf16.msra.mxu0 0
  %328 = vmatprep.subr.bf16.mxu0 0
  %329 = vmatpush1.bf16.msra.mxu0 0
  %330 = vmatprep.subr.bf16.mxu0 0
  %331 = vmatpush1.bf16.msra.mxu0 0
  %332 = vmatprep.subr.bf16.mxu0 0
  %333 = vmatpush1.bf16.msra.mxu0 0
  %334 = vmatprep.mubr.bf16.mxu0 0
  %335 = vmatmul.mubr.bf16.gmra.mrb[0].mxu0 %v279
  %v336 = vpop.f32.mrb[0].mxu0
  %v337 = vadd.f32 0.0, %v336
  %v338 = vpop.f32.mrb[0].mxu0
  %v339 = vpop.f32.mrb[0].mxu0
  %v340 = vadd.f32 0.0, %v339
  %v341 = vpop.f32.mrb[0].mxu0
  %342 = vmatprep.mubr.bf16.mxu0 0
  %343 = vmatmul.mubr.bf16.gmra.mrb[0].mxu0 %v282
  %v344 = vpop.f32.mrb[0].mxu0
  %v345 = vadd.f32 0.0, %v344
  %v346 = vpop.f32.mrb[0].mxu0
  %v347 = vpop.f32.mrb[0].mxu0
  %v348 = vadd.f32 0.0, %v347
  %v349 = vpop.f32.mrb[0].mxu0
  %350 = vmatprep.mubr.bf16.mxu0 0
  %351 = vmatmul.mubr.bf16.gmra.mrb[0].mxu0 %v285
  %v352 = vpop.f32.mrb[0].mxu0
  %v353 = vadd.f32 0.0, %v352
  %v354 = vpop.f32.mrb[0].mxu0
  %v355 = vpop.f32.mrb[0].mxu0
  %v356 = vadd.f32 0.0, %v355
  %v357 = vpop.f32.mrb[0].mxu0
  %358 = vmatprep.mubr.bf16.mxu0 0
  %359 = vmatmul.mubr.bf16.gmra.mrb[0].mxu0 %v288
  %v360 = vpop.f32.mrb[0].mxu0
  %v361 = vadd.f32 0.0, %v360
  %v362 = vpop.f32.mrb[0].mxu0
  %v363 = vpop.f32.mrb[0].mxu0
  %v364 = vadd.f32 0.0, %v363
  %v365 = vpop.f32.mrb[0].mxu0
  %366 = vmatprep.mubr.bf16.mxu0 0
  %367 = vmatmul.mubr.bf16.gmra.mrb[0].mxu0 %v291
  %v368 = vpop.f32.mrb[0].mxu0
  %v369 = vadd.f32 0.0, %v368
  %v370 = vpop.f32.mrb[0].mxu0
  %v371 = vpop.f32.mrb[0].mxu0
  %v372 = vadd.f32 0.0, %v371
  %v373 = vpop.f32.mrb[0].mxu0
  %374 = vmatprep.mubr.bf16.mxu0 0
  %375 = vmatmul.mubr.bf16.gmra.mrb[0].mxu0 %v294
  %v376 = vpop.f32.mrb[0].mxu0
  %v377 = vadd.f32 0.0, %v376
  %v378 = vpop.f32.mrb[0].mxu0
  %v379 = vpop.f32.mrb[0].mxu0
  %v380 = vadd.f32 0.0, %v379
  %v381 = vpop.f32.mrb[0].mxu0
  %382 = vmatprep.mubr.bf16.mxu0 0
  %383 = vmatmul.mubr.bf16.gmra.mrb[0].mxu0 %v297
  %v384 = vpop.f32.mrb[0].mxu0
  %v385 = vadd.f32 0.0, %v384
  %v386 = vpop.f32.mrb[0].mxu0
  %v387 = vpop.f32.mrb[0].mxu0
  %v388 = vadd.f32 0.0, %v387
  %v389 = vpop.f32.mrb[0].mxu0
  %390 = vmatprep.mubr.bf16.mxu0 0
  %391 = vmatmul.mubr.bf16.gmra.mrb[0].mxu0 %v300
  %v392 = vpop.f32.mrb[0].mxu0
  %v393 = vadd.f32 0.0, %v392
  %v394 = vpop.f32.mrb[0].mxu0
  %v395 = vpop.f32.mrb[0].mxu0
  %v396 = vadd.f32 0.0, %v395
  %v397 = vpop.f32.mrb[0].mxu0
  %398 = vdwg.mxu0
  %v399 = vpack.c.bf16 %v340, %v337
  %v400 = vpack.c.bf16 %v348, %v345
  %v401 = vpack.c.bf16 %v356, %v353
  %v402 = vpack.c.bf16 %v364, %v361
  %v403 = vpack.c.bf16 %v372, %v369
  %v404 = vpack.c.bf16 %v380, %v377
  %v405 = vpack.c.bf16 %v388, %v385
  %v406 = vpack.c.bf16 %v396, %v393
  %407 = vmatprep.subr.bf16.mxu0 0
  %408 = vmatpush1.bf16.msra.mxu0 %v399
  %409 = vmatprep.subr.bf16.mxu0 0
  %410 = vmatpush1.bf16.msra.mxu0 %v400
  %411 = vmatprep.subr.bf16.mxu0 0
  %412 = vmatpush1.bf16.msra.mxu0 %v401
  %413 = vmatprep.subr.bf16.mxu0 0
  %414 = vmatpush1.bf16.msra.mxu0 %v402
  %415 = vmatprep.subr.bf16.mxu0 0
  %416 = vmatpush1.bf16.msra.mxu0 %v403
  %417 = vmatprep.subr.bf16.mxu0 0
  %418 = vmatpush1.bf16.msra.mxu0 %v404
  %419 = vmatprep.subr.bf16.mxu0 0
  %420 = vmatpush1.bf16.msra.mxu0 %v405
  %421 = vmatprep.subr.bf16.mxu0 0
  %422 = vmatpush1.bf16.msra.mxu0 %v406
  %423 = vmatprep.subr.bf16.mxu0 0
  %424 = vmatpush1.bf16.msra.mxu0 0
  %425 = vmatprep.subr.bf16.mxu0 0
  %426 = vmatpush1.bf16.msra.mxu0 0
  %427 = vmatprep.subr.bf16.mxu0 0
  %428 = vmatpush1.bf16.msra.mxu0 0
  %429 = vmatprep.subr.bf16.mxu0 0
  %430 = vmatpush1.bf16.msra.mxu0 0
  %431 = vmatprep.subr.bf16.mxu0 0
  %432 = vmatpush1.bf16.msra.mxu0 0
  %433 = vmatprep.subr.bf16.mxu0 0
  %434 = vmatpush1.bf16.msra.mxu0 0
  %435 = vmatprep.subr.bf16.mxu0 0
  %436 = vmatpush1.bf16.msra.mxu0 0
  %437 = vmatprep.subr.bf16.mxu0 0
  %438 = vmatpush1.bf16.msra.mxu0 0
  %439 = vmatprep.mubr.bf16.mxu0 0
  %440 = vmatmul.mubr.bf16.gmra.mrb[0].mxu0 %v28
  %v441 = vpop.f32.mrb[0].mxu0
  %v442 = vadd.f32 0.0, %v441
  %v443 = vpop.f32.mrb[0].mxu0
  %v444 = vpop.f32.mrb[0].mxu0
  %v445 = vadd.f32 0.0, %v444
  %v446 = vpop.f32.mrb[0].mxu0
  %447 = vmatprep.mubr.bf16.mxu0 0
  %448 = vmatmul.mubr.bf16.gmra.mrb[0].mxu0 %v29
  %v449 = vpop.f32.mrb[0].mxu0
  %v450 = vadd.f32 0.0, %v449
  %v451 = vpop.f32.mrb[0].mxu0
  %v452 = vpop.f32.mrb[0].mxu0
  %v453 = vadd.f32 0.0, %v452
  %v454 = vpop.f32.mrb[0].mxu0
  %455 = vmatprep.mubr.bf16.mxu0 0
  %456 = vmatmul.mubr.bf16.gmra.mrb[0].mxu0 %v30
  %v457 = vpop.f32.mrb[0].mxu0
  %v458 = vadd.f32 0.0, %v457
  %v459 = vpop.f32.mrb[0].mxu0
  %v460 = vpop.f32.mrb[0].mxu0
  %v461 = vadd.f32 0.0, %v460
  %v462 = vpop.f32.mrb[0].mxu0
  %463 = vmatprep.mubr.bf16.mxu0 0
  %464 = vmatmul.mubr.bf16.gmra.mrb[0].mxu0 %v31
  %v465 = vpop.f32.mrb[0].mxu0
  %v466 = vadd.f32 0.0, %v465
  %v467 = vpop.f32.mrb[0].mxu0
  %v468 = vpop.f32.mrb[0].mxu0
  %v469 = vadd.f32 0.0, %v468
  %v470 = vpop.f32.mrb[0].mxu0
  %471 = vmatprep.mubr.bf16.mxu0 0
  %472 = vmatmul.mubr.bf16.gmra.mrb[0].mxu0 %v32
  %v473 = vpop.f32.mrb[0].mxu0
  %v474 = vadd.f32 0.0, %v473
  %v475 = vpop.f32.mrb[0].mxu0
  %v476 = vpop.f32.mrb[0].mxu0
  %v477 = vadd.f32 0.0, %v476
  %v478 = vpop.f32.mrb[0].mxu0
  %479 = vmatprep.mubr.bf16.mxu0 0
  %480 = vmatmul.mubr.bf16.gmra.mrb[0].mxu0 %v33
  %v481 = vpop.f32.mrb[0].mxu0
  %v482 = vadd.f32 0.0, %v481
  %v483 = vpop.f32.mrb[0].mxu0
  %v484 = vpop.f32.mrb[0].mxu0
  %v485 = vadd.f32 0.0, %v484
  %v486 = vpop.f32.mrb[0].mxu0
  %487 = vmatprep.mubr.bf16.mxu0 0
  %488 = vmatmul.mubr.bf16.gmra.mrb[0].mxu0 %v34
  %v489 = vpop.f32.mrb[0].mxu0
  %v490 = vadd.f32 0.0, %v489
  %v491 = vpop.f32.mrb[0].mxu0
  %v492 = vpop.f32.mrb[0].mxu0
  %v493 = vadd.f32 0.0, %v492
  %v494 = vpop.f32.mrb[0].mxu0
  %495 = vmatprep.mubr.bf16.mxu0 0
  %496 = vmatmul.mubr.bf16.gmra.mrb[0].mxu0 %v35
  %v497 = vpop.f32.mrb[0].mxu0
  %v498 = vadd.f32 0.0, %v497
  %v499 = vpop.f32.mrb[0].mxu0
  %v500 = vpop.f32.mrb[0].mxu0
  %v501 = vadd.f32 0.0, %v500
  %v502 = vpop.f32.mrb[0].mxu0
  %503 = vdwg.mxu0
  %v512 = vunpack.c.l.b16 %v237
  %v513 = vunpack.c.l.b16 %v238
  %v514 = vunpack.c.l.b16 %v239
  %v515 = vunpack.c.l.b16 %v240
  %v516 = vunpack.c.l.b16 %v241
  %v517 = vunpack.c.l.b16 %v242
  %v518 = vunpack.c.l.b16 %v243
  %v519 = vunpack.c.l.b16 %v244
  %v520 = vpack.c.b16 %v513, %v512
  %v521 = vpack.c.b16 %v515, %v514
  %v522 = vpack.c.b16 %v517, %v516
  %v523 = vpack.c.b16 %v519, %v518
  %528 = vmatprep.subr.bf16.mxu0 0
  %529 = vmatpush1.bf16.msra.mxu0 %v520
  %530 = vmatprep.subr.bf16.mxu0 0
  %531 = vmatpush1.bf16.msra.mxu0 %v521
  %532 = vmatprep.subr.bf16.mxu0 0
  %533 = vmatpush1.bf16.msra.mxu0 %v522
  %534 = vmatprep.subr.bf16.mxu0 0
  %535 = vmatpush1.bf16.msra.mxu0 %v523
  %536 = vmatprep.subr.bf16.mxu0 0
  %537 = vmatpush1.bf16.msra.mxu0 0
  %538 = vmatprep.subr.bf16.mxu0 0
  %539 = vmatpush1.bf16.msra.mxu0 0
  %540 = vmatprep.subr.bf16.mxu0 0
  %541 = vmatpush1.bf16.msra.mxu0 0
  %542 = vmatprep.subr.bf16.mxu0 0
  %543 = vmatpush1.bf16.msra.mxu0 0
  %544 = vmatprep.subr.bf16.mxu0 0
  %545 = vmatpush1.bf16.msra.mxu0 0
  %546 = vmatprep.subr.bf16.mxu0 0
  %547 = vmatpush1.bf16.msra.mxu0 0
  %548 = vmatprep.subr.bf16.mxu0 0
  %549 = vmatpush1.bf16.msra.mxu0 0
  %550 = vmatprep.subr.bf16.mxu0 0
  %551 = vmatpush1.bf16.msra.mxu0 0
  %552 = vmatprep.subr.bf16.mxu0 0
  %553 = vmatpush1.bf16.msra.mxu0 0
  %554 = vmatprep.subr.bf16.mxu0 0
  %555 = vmatpush1.bf16.msra.mxu0 0
  %556 = vmatprep.subr.bf16.mxu0 0
  %557 = vmatpush1.bf16.msra.mxu0 0
  %558 = vmatprep.subr.bf16.mxu0 0
  %559 = vmatpush1.bf16.msra.mxu0 0
  %560 = vmatprep.mubr.bf16.mxu0 0
  %561 = vmatmul.mubr.bf16.gmra.mrb[0].mxu0 %v279
  %v562 = vpop.f32.mrb[0].mxu0
  %v563 = vadd.f32 %v442, %v562
  %v564 = vpop.f32.mrb[0].mxu0
  %v565 = vpop.f32.mrb[0].mxu0
  %v566 = vadd.f32 %v445, %v565
  %v567 = vpop.f32.mrb[0].mxu0
  %568 = vmatprep.mubr.bf16.mxu0 0
  %569 = vmatmul.mubr.bf16.gmra.mrb[0].mxu0 %v282
  %v570 = vpop.f32.mrb[0].mxu0
  %v571 = vadd.f32 %v450, %v570
  %v572 = vpop.f32.mrb[0].mxu0
  %v573 = vpop.f32.mrb[0].mxu0
  %v574 = vadd.f32 %v453, %v573
  %v575 = vpop.f32.mrb[0].mxu0
  %576 = vmatprep.mubr.bf16.mxu0 0
  %577 = vmatmul.mubr.bf16.gmra.mrb[0].mxu0 %v285
  %v578 = vpop.f32.mrb[0].mxu0
  %v579 = vadd.f32 %v458, %v578
  %v580 = vpop.f32.mrb[0].mxu0
  %v581 = vpop.f32.mrb[0].mxu0
  %v582 = vadd.f32 %v461, %v581
  %v583 = vpop.f32.mrb[0].mxu0
  %584 = vmatprep.mubr.bf16.mxu0 0
  %585 = vmatmul.mubr.bf16.gmra.mrb[0].mxu0 %v288
  %v586 = vpop.f32.mrb[0].mxu0
  %v587 = vadd.f32 %v466, %v586
  %v588 = vpop.f32.mrb[0].mxu0
  %v589 = vpop.f32.mrb[0].mxu0
  %v590 = vadd.f32 %v469, %v589
  %v591 = vpop.f32.mrb[0].mxu0
  %592 = vmatprep.mubr.bf16.mxu0 0
  %593 = vmatmul.mubr.bf16.gmra.mrb[0].mxu0 %v291
  %v594 = vpop.f32.mrb[0].mxu0
  %v595 = vadd.f32 %v474, %v594
  %v596 = vpop.f32.mrb[0].mxu0
  %v597 = vpop.f32.mrb[0].mxu0
  %v598 = vadd.f32 %v477, %v597
  %v599 = vpop.f32.mrb[0].mxu0
  %600 = vmatprep.mubr.bf16.mxu0 0
  %601 = vmatmul.mubr.bf16.gmra.mrb[0].mxu0 %v294
  %v602 = vpop.f32.mrb[0].mxu0
  %v603 = vadd.f32 %v482, %v602
  %v604 = vpop.f32.mrb[0].mxu0
  %v605 = vpop.f32.mrb[0].mxu0
  %v606 = vadd.f32 %v485, %v605
  %v607 = vpop.f32.mrb[0].mxu0
  %608 = vmatprep.mubr.bf16.mxu0 0
  %609 = vmatmul.mubr.bf16.gmra.mrb[0].mxu0 %v297
  %v610 = vpop.f32.mrb[0].mxu0
  %v611 = vadd.f32 %v490, %v610
  %v612 = vpop.f32.mrb[0].mxu0
  %v613 = vpop.f32.mrb[0].mxu0
  %v614 = vadd.f32 %v493, %v613
  %v615 = vpop.f32.mrb[0].mxu0
  %616 = vmatprep.mubr.bf16.mxu0 0
  %617 = vmatmul.mubr.bf16.gmra.mrb[0].mxu0 %v300
  %v618 = vpop.f32.mrb[0].mxu0
  %v619 = vadd.f32 %v498, %v618
  %v620 = vpop.f32.mrb[0].mxu0
  %v621 = vpop.f32.mrb[0].mxu0
  %v622 = vadd.f32 %v501, %v621
  %v623 = vpop.f32.mrb[0].mxu0
  %624 = vdwg.mxu0
  %v625 = vld [vmem:[%s5] sm:$0x1]
  %v627 = vlaneseq
  %v628 = vshrl.u32 %v627, 7
  %v629 = vsub.s32 0, %v628
  %v630 = vrot.slane %v625, %v629
  %v632 = vadd.f32 %v563, %v630
  %v633 = vadd.f32 %v566, %v630
  %v634 = vadd.f32 %v571, %v630
  %v635 = vadd.f32 %v574, %v630
  %v636 = vadd.f32 %v579, %v630
  %v637 = vadd.f32 %v582, %v630
  %v638 = vadd.f32 %v587, %v630
  %v639 = vadd.f32 %v590, %v630
  %v640 = vadd.f32 %v595, %v630
  %v641 = vadd.f32 %v598, %v630
  %v642 = vadd.f32 %v603, %v630
  %v643 = vadd.f32 %v606, %v630
  %v644 = vadd.f32 %v611, %v630
  %v645 = vadd.f32 %v614, %v630
  %v646 = vadd.f32 %v619, %v630
  %v647 = vadd.f32 %v622, %v630
  %vm648 = vcmask 64512
  %v649 = vsel %vm648, %v632, -inf
  %650 = vmax.xlane.f32.xlu0 %v649
  %v651 = vpop.xlane.xlu0 %650
  %v652 = vsel %vm648, %v633, -inf
  %653 = vmax.xlane.f32.xlu0 %v652
  %v654 = vpop.xlane.xlu0 %653
  %v655 = vsel %vm648, %v634, -inf
  %656 = vmax.xlane.f32.xlu0 %v655
  %v657 = vpop.xlane.xlu0 %656
  %v658 = vsel %vm648, %v635, -inf
  %659 = vmax.xlane.f32.xlu0 %v658
  %v660 = vpop.xlane.xlu0 %659
  %v661 = vsel %vm648, %v636, -inf
  %662 = vmax.xlane.f32.xlu0 %v661
  %v663 = vpop.xlane.xlu0 %662
  %v664 = vsel %vm648, %v637, -inf
  %665 = vmax.xlane.f32.xlu0 %v664
  %v666 = vpop.xlane.xlu0 %665
  %v667 = vsel %vm648, %v638, -inf
  %668 = vmax.xlane.f32.xlu0 %v667
  %v669 = vpop.xlane.xlu0 %668
  %v670 = vsel %vm648, %v639, -inf
  %671 = vmax.xlane.f32.xlu0 %v670
  %v672 = vpop.xlane.xlu0 %671
  %v673 = vsel %vm648, %v640, -inf
  %674 = vmax.xlane.f32.xlu0 %v673
  %v675 = vpop.xlane.xlu0 %674
  %v676 = vsel %vm648, %v641, -inf
  %677 = vmax.xlane.f32.xlu0 %v676
  %v678 = vpop.xlane.xlu0 %677
  %v679 = vsel %vm648, %v642, -inf
  %680 = vmax.xlane.f32.xlu0 %v679
  %v681 = vpop.xlane.xlu0 %680
  %v682 = vsel %vm648, %v643, -inf
  %683 = vmax.xlane.f32.xlu0 %v682
  %v684 = vpop.xlane.xlu0 %683
  %v685 = vsel %vm648, %v644, -inf
  %686 = vmax.xlane.f32.xlu0 %v685
  %v687 = vpop.xlane.xlu0 %686
  %v688 = vsel %vm648, %v645, -inf
  %689 = vmax.xlane.f32.xlu0 %v688
  %v690 = vpop.xlane.xlu0 %689
  %v691 = vsel %vm648, %v646, -inf
  %692 = vmax.xlane.f32.xlu0 %v691
  %v693 = vpop.xlane.xlu0 %692
  %v694 = vsel %vm648, %v647, -inf
  %695 = vmax.xlane.f32.xlu0 %v694
  %v696 = vpop.xlane.xlu0 %695
  %v697 = vsub.f32 %v632, %v651
  %v698 = vsub.f32 %v633, %v654
  %v699 = vsub.f32 %v634, %v657
  %v700 = vsub.f32 %v635, %v660
  %v701 = vsub.f32 %v636, %v663
  %v702 = vsub.f32 %v637, %v666
  %v703 = vsub.f32 %v638, %v669
  %v704 = vsub.f32 %v639, %v672
  %v705 = vsub.f32 %v640, %v675
  %v706 = vsub.f32 %v641, %v678
  %v707 = vsub.f32 %v642, %v681
  %v708 = vsub.f32 %v643, %v684
  %v709 = vsub.f32 %v644, %v687
  %v710 = vsub.f32 %v645, %v690
  %v711 = vsub.f32 %v646, %v693
  %v712 = vsub.f32 %v647, %v696
  %v713 = vmul.f32 %v697, 1.442695
  %v714 = vpow.pop %v713
  %v715 = vmul.f32 %v698, 1.442695
  %v716 = vpow.pop %v715
  %v717 = vmul.f32 %v699, 1.442695
  %v718 = vpow.pop %v717
  %v719 = vmul.f32 %v700, 1.442695
  %v720 = vpow.pop %v719
  %v721 = vmul.f32 %v701, 1.442695
  %v722 = vpow.pop %v721
  %v723 = vmul.f32 %v702, 1.442695
  %v724 = vpow.pop %v723
  %v725 = vmul.f32 %v703, 1.442695
  %v726 = vpow.pop %v725
  %v727 = vmul.f32 %v704, 1.442695
  %v728 = vpow.pop %v727
  %v729 = vmul.f32 %v705, 1.442695
  %v730 = vpow.pop %v729
  %v731 = vmul.f32 %v706, 1.442695
  %v732 = vpow.pop %v731
  %v733 = vmul.f32 %v707, 1.442695
  %v734 = vpow.pop %v733
  %v735 = vmul.f32 %v708, 1.442695
  %v736 = vpow.pop %v735
  %v737 = vmul.f32 %v709, 1.442695
  %v738 = vpow.pop %v737
  %v739 = vmul.f32 %v710, 1.442695
  %v740 = vpow.pop %v739
  %v741 = vmul.f32 %v711, 1.442695
  %v742 = vpow.pop %v741
  %v743 = vmul.f32 %v712, 1.442695
  %v744 = vpow.pop %v743
  %v745 = vsel %vm648, %v714, 0.0
  %746 = vadd.xlane.f32.xlu0 %v745
  %v747 = vpop.xlane.xlu0 %746
  %v748 = vsel %vm648, %v716, 0.0
  %749 = vadd.xlane.f32.xlu0 %v748
  %v750 = vpop.xlane.xlu0 %749
  %v751 = vsel %vm648, %v718, 0.0
  %752 = vadd.xlane.f32.xlu0 %v751
  %v753 = vpop.xlane.xlu0 %752
  %v754 = vsel %vm648, %v720, 0.0
  %755 = vadd.xlane.f32.xlu0 %v754
  %v756 = vpop.xlane.xlu0 %755
  %v757 = vsel %vm648, %v722, 0.0
  %758 = vadd.xlane.f32.xlu0 %v757
  %v759 = vpop.xlane.xlu0 %758
  %v760 = vsel %vm648, %v724, 0.0
  %761 = vadd.xlane.f32.xlu0 %v760
  %v762 = vpop.xlane.xlu0 %761
  %v763 = vsel %vm648, %v726, 0.0
  %764 = vadd.xlane.f32.xlu0 %v763
  %v765 = vpop.xlane.xlu0 %764
  %v766 = vsel %vm648, %v728, 0.0
  %767 = vadd.xlane.f32.xlu0 %v766
  %v768 = vpop.xlane.xlu0 %767
  %v769 = vsel %vm648, %v730, 0.0
  %770 = vadd.xlane.f32.xlu0 %v769
  %v771 = vpop.xlane.xlu0 %770
  %v772 = vsel %vm648, %v732, 0.0
  %773 = vadd.xlane.f32.xlu0 %v772
  %v774 = vpop.xlane.xlu0 %773
  %v775 = vsel %vm648, %v734, 0.0
  %776 = vadd.xlane.f32.xlu0 %v775
  %v777 = vpop.xlane.xlu0 %776
  %v778 = vsel %vm648, %v736, 0.0
  %779 = vadd.xlane.f32.xlu0 %v778
  %v780 = vpop.xlane.xlu0 %779
  %v781 = vsel %vm648, %v738, 0.0
  %782 = vadd.xlane.f32.xlu0 %v781
  %v783 = vpop.xlane.xlu0 %782
  %v784 = vsel %vm648, %v740, 0.0
  %785 = vadd.xlane.f32.xlu0 %v784
  %v786 = vpop.xlane.xlu0 %785
  %v787 = vsel %vm648, %v742, 0.0
  %788 = vadd.xlane.f32.xlu0 %v787
  %v789 = vpop.xlane.xlu0 %788
  %v790 = vsel %vm648, %v744, 0.0
  %791 = vadd.xlane.f32.xlu0 %v790
  %v792 = vpop.xlane.xlu0 %791
  %v793 = vlog2.pop %v747
  %v794 = vmul.f32 %v793, 0.6931472
  %v795 = vlog2.pop %v750
  %v796 = vmul.f32 %v795, 0.6931472
  %v797 = vlog2.pop %v753
  %v798 = vmul.f32 %v797, 0.6931472
  %v799 = vlog2.pop %v756
  %v800 = vmul.f32 %v799, 0.6931472
  %v801 = vlog2.pop %v759
  %v802 = vmul.f32 %v801, 0.6931472
  %v803 = vlog2.pop %v762
  %v804 = vmul.f32 %v803, 0.6931472
  %v805 = vlog2.pop %v765
  %v806 = vmul.f32 %v805, 0.6931472
  %v807 = vlog2.pop %v768
  %v808 = vmul.f32 %v807, 0.6931472
  %v809 = vlog2.pop %v771
  %v810 = vmul.f32 %v809, 0.6931472
  %v811 = vlog2.pop %v774
  %v812 = vmul.f32 %v811, 0.6931472
  %v813 = vlog2.pop %v777
  %v814 = vmul.f32 %v813, 0.6931472
  %v815 = vlog2.pop %v780
  %v816 = vmul.f32 %v815, 0.6931472
  %v817 = vlog2.pop %v783
  %v818 = vmul.f32 %v817, 0.6931472
  %v819 = vlog2.pop %v786
  %v820 = vmul.f32 %v819, 0.6931472
  %v821 = vlog2.pop %v789
  %v822 = vmul.f32 %v821, 0.6931472
  %v823 = vlog2.pop %v792
  %v824 = vmul.f32 %v823, 0.6931472
  %v825 = vsub.f32 %v697, %v794
  %v826 = vsub.f32 %v698, %v796
  %v827 = vsub.f32 %v699, %v798
  %v828 = vsub.f32 %v700, %v800
  %v829 = vsub.f32 %v701, %v802
  %v830 = vsub.f32 %v702, %v804
  %v831 = vsub.f32 %v703, %v806
  %v832 = vsub.f32 %v704, %v808
  %v833 = vsub.f32 %v705, %v810
  %v834 = vsub.f32 %v706, %v812
  %v835 = vsub.f32 %v707, %v814
  %v836 = vsub.f32 %v708, %v816
  %v837 = vsub.f32 %v709, %v818
  %v838 = vsub.f32 %v710, %v820
  %v839 = vsub.f32 %v711, %v822
  %v840 = vsub.f32 %v712, %v824
  %841 = vst.msk [vmem:[%s6] sm:$0xff] %vm648, %v825
  %842 = vst.msk [vmem:[%s6 + $0x8] sm:$0xff] %vm648, %v826
  %843 = vst.msk [vmem:[%s6 + $0x10] sm:$0xff] %vm648, %v827
  %844 = vst.msk [vmem:[%s6 + $0x18] sm:$0xff] %vm648, %v828
  %845 = vst.msk [vmem:[%s6 + $0x20] sm:$0xff] %vm648, %v829
  %846 = vst.msk [vmem:[%s6 + $0x28] sm:$0xff] %vm648, %v830
  %847 = vst.msk [vmem:[%s6 + $0x30] sm:$0xff] %vm648, %v831
  %848 = vst.msk [vmem:[%s6 + $0x38] sm:$0xff] %vm648, %v832
  %849 = vst.msk [vmem:[%s6 + $0x40] sm:$0xff] %vm648, %v833
  %850 = vst.msk [vmem:[%s6 + $0x48] sm:$0xff] %vm648, %v834
  %851 = vst.msk [vmem:[%s6 + $0x50] sm:$0xff] %vm648, %v835
  %852 = vst.msk [vmem:[%s6 + $0x58] sm:$0xff] %vm648, %v836
  %853 = vst.msk [vmem:[%s6 + $0x60] sm:$0xff] %vm648, %v837
  %854 = vst.msk [vmem:[%s6 + $0x68] sm:$0xff] %vm648, %v838
  %855 = vst.msk [vmem:[%s6 + $0x70] sm:$0xff] %vm648, %v839
  %856 = vst.msk [vmem:[%s6 + $0x78] sm:$0xff] %vm648, %v840
  // Predicated region
  $region26: #{graphnet_forward.1} parent=0 // pred_check
    _
  $region27: #{graphnet_forward.1} parent=0 // pred_check_branch
    %858 = sbr.rel (0) target = $region29
  $region28: #{graphnet_forward.1} parent=0 // pred_region
    _
  $region29: #{graphnet_forward.1} parent=0 // pred_fallthru
    _
  // Predicated region
  $region30: #{graphnet_forward.1} parent=0 // pred_check
    _
  $region31: #{graphnet_forward.1} parent=0 // pred_check_branch
    %860 = sbr.rel (0) target = $region33
  $region32: #{graphnet_forward.1} parent=0 // pred_region
    _
  $region33: #{graphnet_forward.1} parent=0 // pred_fallthru
    _

</llo_original>
